<compile_context>
chip_gen: v7x
topology: tpu7x:2x2x1
jax: 0.10.0
libtpu: 0.0.40
codegen_flags: <defaults>
</compile_context>

<pallas_src>
import functools

import jax
import jax.numpy as jnp
from jax import lax
from jax.experimental import pallas as pl
from jax.experimental.pallas import tpu as pltpu

_EPS = 1e-6
_LANES = 128
_SUBLANES = 8


def _round_up(x: int, m: int) -> int:
    return ((x + m - 1) // m) * m


# ---------------------------------------------------------------------------
# Path A (common case): whole F*T row per block, several batch rows per step.
# ---------------------------------------------------------------------------
def _normalize_rows_kernel(x_ref, o_ref, *, inv_n, inv_nm1):
    # Block = (bt, FT): full rows, so the per-row reductions over axis=-1 see
    # exactly the logical F*T elements (no lane masking needed).  Rows of a
    # partial trailing batch block contain unspecified data, but the per-row
    # reductions keep them isolated and their results are dropped on the
    # out-of-bounds write.
    x = x_ref[...].astype(jnp.float32)
    mean = jnp.sum(x, axis=-1, keepdims=True) * inv_n
    d = x - mean
    # Centered (second in-VMEM pass) variance: the tile is already resident, so
    # this extra VPU/XLU work is hidden under the HBM roofline and avoids the
    # cancellation error of the one-pass sum-of-squares formula.
    var = jnp.sum(d * d, axis=-1, keepdims=True) * inv_nm1
    inv_std = 1.0 / (jnp.sqrt(var) + _EPS)   # tiny (bt,1) tensor; exact divide
    o_ref[...] = (d * inv_std).astype(o_ref.dtype)


# ---------------------------------------------------------------------------
# Path B (long rows): tile the F*T axis.  Two calls: stats (reduction grid
# axis, per-row accumulators) then a purely elementwise apply pass.
# ---------------------------------------------------------------------------
def _stats_kernel(x_ref, mean_ref, istd_ref, s1_ref, s2_ref, *,
                  ft, ft_tile, inv_n, inv_nm1):
    j = pl.program_id(1)

    @pl.when(j == 0)
    def _():
        s1_ref[...] = jnp.zeros_like(s1_ref)
        s2_ref[...] = jnp.zeros_like(s2_ref)

    x = x_ref[...].astype(jnp.float32)
    # Ragged F*T tail: out-of-bounds block contents are unspecified, so mask
    # them explicitly (do NOT assume zeros).
    col = j * ft_tile + lax.broadcasted_iota(jnp.int32, x.shape, 1)
    x = jnp.where(col < ft, x, 0.0)
    s1_ref[...] += jnp.sum(x, axis=-1, keepdims=True)
    s2_ref[...] += jnp.sum(x * x, axis=-1, keepdims=True)

    @pl.when(j == pl.num_programs(1) - 1)
    def _():
        s1 = s1_ref[...]
        mean = s1 * inv_n
        var = jnp.maximum((s2_ref[...] - s1 * mean) * inv_nm1, 0.0)
        mean_ref[...] = mean
        istd_ref[...] = 1.0 / (jnp.sqrt(var) + _EPS)


def _apply_kernel(x_ref, mean_ref, istd_ref, o_ref):
    x = x_ref[...].astype(jnp.float32)
    o_ref[...] = ((x - mean_ref[...]) * istd_ref[...]).astype(o_ref.dtype)


# ---------------------------------------------------------------------------
# Wrapper
# ---------------------------------------------------------------------------
def _pick_row_block(batch_size, row_bytes, max_block_bytes, target_steps):
    """Rows per grid step: byte-budget bound, sublane-rule compliant, and capped
    so the grid keeps several steps (v7x megacore sharding + pipelining)."""
    bt = max(1, int(max_block_bytes // row_bytes))
    if batch_size > _SUBLANES:
        steps = min(target_steps, pl.cdiv(batch_size, _SUBLANES))
        bt = min(bt, pl.cdiv(batch_size, steps))
    if bt >= batch_size:
        return batch_size                      # block == full batch dim (rule-OK)
    if batch_size <= _SUBLANES:
        return batch_size                      # can't split below 8 sublane rows
    return max(_SUBLANES, (bt // _SUBLANES) * _SUBLANES)


def _vmem_limit(block_bytes: int) -> int:
    # in + out, double-buffered, plus headroom; stay under v7x's 64 MiB physical.
    return int(min(64 << 20, max(32 << 20, 5 * block_bytes)))


def normalize_batch(batch: jax.Array, *,
                    max_block_bytes: int = 4 << 20,
                    single_pass_max_block_bytes: int = 8 << 20,
                    target_grid_steps: int = 8,
                    donate_input: bool = False) -> jax.Array:
    """Per-sample normalization over dims (1, 2) of a [B, F, T] array."""
    if batch.ndim != 3:
        raise ValueError(f"expected [B, F, T], got shape {batch.shape}")
    B, F, T = batch.shape
    FT = F * T
    x2 = batch.reshape(B, FT)                  # free layout view; no HBM traffic

    inv_n = 1.0 / FT
    # torch.std(ddof=1) yields NaN for a single element; keep that semantic.
    inv_nm1 = 1.0 / (FT - 1) if FT > 1 else float("nan")

    ft_lanes = _round_up(FT, _LANES)           # VMEM lane footprint of one row
    row_bytes = ft_lanes * 4                   # conservative f32 working row
    min_rows = B if B < _SUBLANES else _SUBLANES
    io_aliases = {0: 0} if donate_input else {}

    # ---------------- Path A: single pass, full rows per block ----------------
    if min_rows * row_bytes <= max(single_pass_max_block_bytes, max_block_bytes):
        bt = _pick_row_block(B, row_bytes, max_block_bytes, target_grid_steps)
        block_bytes = bt * row_bytes
        kernel = functools.partial(_normalize_rows_kernel, inv_n=inv_n, inv_nm1=inv_nm1)
        out = pl.pallas_call(
            kernel,
            out_shape=jax.ShapeDtypeStruct((B, FT), batch.dtype),
            grid_spec=pltpu.PrefetchScalarGridSpec(
                num_scalar_prefetch=0,
                grid=(pl.cdiv(B, bt),),
                in_specs=[pl.BlockSpec((bt, FT), lambda i: (i, 0))],
                out_specs=pl.BlockSpec((bt, FT), lambda i: (i, 0)),
            ),
            compiler_params=pltpu.CompilerParams(
                dimension_semantics=("parallel",),
                vmem_limit_bytes=_vmem_limit(block_bytes),
            ),
            input_output_aliases=io_aliases,
        )(x2)
        return out.reshape(B, F, T)

    # -------- Path B: rows too long for one VMEM block; tile the F*T axis ------
    bt = min_rows
    ft_tile = max(_LANES, (int(max_block_bytes) // (bt * 4)) // _LANES * _LANES)
    ft_tile = min(ft_tile, ft_lanes)
    grid = (pl.cdiv(B, bt), pl.cdiv(FT, ft_tile))
    block_bytes = bt * ft_tile * 4

    mean, inv_std = pl.pallas_call(
        functools.partial(_stats_kernel, ft=FT, ft_tile=ft_tile,
                          inv_n=inv_n, inv_nm1=inv_nm1),
        out_shape=(jax.ShapeDtypeStruct((B, 1), jnp.float32),
                   jax.ShapeDtypeStruct((B, 1), jnp.float32)),
        grid_spec=pltpu.PrefetchScalarGridSpec(
            num_scalar_prefetch=0,
            grid=grid,
            in_specs=[pl.BlockSpec((bt, ft_tile), lambda i, j: (i, j))],
            out_specs=[pl.BlockSpec((bt, 1), lambda i, j: (i, 0)),
                       pl.BlockSpec((bt, 1), lambda i, j: (i, 0))],
            scratch_shapes=[pltpu.VMEM((bt, 1), jnp.float32),
                            pltpu.VMEM((bt, 1), jnp.float32)],
        ),
        compiler_params=pltpu.CompilerParams(
            dimension_semantics=("parallel", "arbitrary"),
            vmem_limit_bytes=_vmem_limit(block_bytes),
        ),
    )(x2)

    out = pl.pallas_call(
        _apply_kernel,
        out_shape=jax.ShapeDtypeStruct((B, FT), batch.dtype),
        grid_spec=pltpu.PrefetchScalarGridSpec(
            num_scalar_prefetch=0,
            grid=grid,
            in_specs=[pl.BlockSpec((bt, ft_tile), lambda i, j: (i, j)),
                      pl.BlockSpec((bt, 1), lambda i, j: (i, 0)),
                      pl.BlockSpec((bt, 1), lambda i, j: (i, 0))],
            out_specs=pl.BlockSpec((bt, ft_tile), lambda i, j: (i, j)),
        ),
        compiler_params=pltpu.CompilerParams(
            dimension_semantics=("parallel", "parallel"),
            vmem_limit_bytes=_vmem_limit(block_bytes),
        ),
        input_output_aliases=io_aliases,
    )(x2, mean, inv_std)
    return out.reshape(B, F, T)


# ---------------------------------------------------------------------------
# Self-test
# ---------------------------------------------------------------------------
def _reference(batch: jax.Array) -> jax.Array:
    x = batch.astype(jnp.float32)
    mean = jnp.mean(x, axis=(1, 2), keepdims=True)
    std = jnp.std(x, axis=(1, 2), keepdims=True, ddof=1)   # unbiased, like torch.std
    return (x - mean) / (std + 1e-6)


if __name__ == "__main__":
    key = jax.random.PRNGKey(0)

    # Case 1: F*T a multiple of 128, tiny batch (single grid step).
    x1 = jax.random.normal(key, (2, 16, 16), dtype=jnp.float32) * 3.0 + 1.5
    o1 = normalize_batch(x1)
    jax.block_until_ready(o1)
    assert o1.shape == x1.shape
    assert jnp.allclose(o1, _reference(x1), atol=1e-4, rtol=1e-4), "case1 mismatch"

    # Case 2: ragged F*T (not a multiple of 128) -> masked tail vregs, no pads.
    x2 = jax.random.normal(jax.random.fold_in(key, 1), (3, 10, 30),
                           dtype=jnp.float32) * 0.7 - 2.0
    o2 = normalize_batch(x2)
    jax.block_until_ready(o2)
    assert jnp.allclose(o2, _reference(x2), atol=1e-4, rtol=1e-4), "case2 mismatch"

    # Case 3: multi-step grid with a partial trailing batch block (OOB rows dropped).
    x3 = jax.random.normal(jax.random.fold_in(key, 2), (10, 8, 32),
                           dtype=jnp.float32) * 2.0 + 0.5
    o3 = normalize_batch(x3, max_block_bytes=4096)
    jax.block_until_ready(o3)
    assert jnp.allclose(o3, _reference(x3), atol=1e-4, rtol=1e-4), "case3 mismatch"

    # Case 4: long-row fallback (stats->apply two-call path, ragged F*T tile tail).
    x4 = jax.random.normal(jax.random.fold_in(key, 3), (5, 4, 300),
                           dtype=jnp.float32) * 1.3 + 4.0
    o4 = normalize_batch(x4, max_block_bytes=4096, single_pass_max_block_bytes=8192)
    jax.block_until_ready(o4)
    assert jnp.allclose(o4, _reference(x4), atol=1e-4, rtol=1e-4), "case4 mismatch"

    # Case 5: bf16 input/output path.
    x5 = (jax.random.normal(jax.random.fold_in(key, 4), (4, 8, 48),
                            dtype=jnp.float32) * 2.0 + 1.0).astype(jnp.bfloat16)
    o5 = normalize_batch(x5)
    jax.block_until_ready(o5)
    assert o5.dtype == jnp.bfloat16
    assert jnp.allclose(o5.astype(jnp.float32), _reference(x5), atol=5e-2, rtol=5e-2), \
        "case5 mismatch"

    print("KERNEL_OK")
</pallas_src>

<mosaic_0001>
module attributes {stable_mosaic.version = 11 : i64} {
  func.func @_normalize_rows_kernel(%arg0: i32, %arg1: memref<2x256xf32, #tpu.memory_space<vmem>>, %arg2: memref<2x256xf32, #tpu.memory_space<vmem>>) attributes {dimension_semantics = [#tpu.dimension_semantics<parallel>], iteration_bounds = array<i64: 1>, scalar_prefetch = 0 : i64, scratch_operands = 0 : i64, tpu.core_type = #tpu.core_type<tc>, window_params = [{transform_indices = @transform_0, window_bounds = array<i64: 2, 256>}, {transform_indices = @transform_1, window_bounds = array<i64: 2, 256>}]} {
    %c0 = arith.constant 0 : index
    %c0_0 = arith.constant 0 : index
    %0 = vector.load %arg1[%c0, %c0_0] : memref<2x256xf32, #tpu.memory_space<vmem>>, vector<2x256xf32>
    %cst = arith.constant dense<0.000000e+00> : vector<2xf32>
    %1 = vector.multi_reduction <add>, %0, %cst [1] : vector<2x256xf32> to vector<2xf32>
    %2 = vector.shape_cast %1 : vector<2xf32> to vector<2x1xf32>
    %cst_1 = arith.constant 3.906250e-03 : f32
    %3 = vector.broadcast %cst_1 : f32 to vector<2x1xf32>
    %4 = arith.mulf %2, %3 : vector<2x1xf32>
    %5 = vector.broadcast %4 : vector<2x1xf32> to vector<2x256xf32>
    %6 = arith.subf %0, %5 : vector<2x256xf32>
    %7 = arith.mulf %6, %6 : vector<2x256xf32>
    %cst_2 = arith.constant dense<0.000000e+00> : vector<2xf32>
    %8 = vector.multi_reduction <add>, %7, %cst_2 [1] : vector<2x256xf32> to vector<2xf32>
    %9 = vector.shape_cast %8 : vector<2xf32> to vector<2x1xf32>
    %cst_3 = arith.constant 0.00392156886 : f32
    %10 = vector.broadcast %cst_3 : f32 to vector<2x1xf32>
    %11 = arith.mulf %9, %10 : vector<2x1xf32>
    %12 = math.sqrt %11 : vector<2x1xf32>
    %cst_4 = arith.constant 9.99999997E-7 : f32
    %13 = vector.broadcast %cst_4 : f32 to vector<2x1xf32>
    %14 = arith.addf %12, %13 : vector<2x1xf32>
    %cst_5 = arith.constant 1.000000e+00 : f32
    %15 = vector.broadcast %cst_5 : f32 to vector<2x1xf32>
    %16 = arith.divf %15, %14 : vector<2x1xf32>
    %17 = vector.broadcast %16 : vector<2x1xf32> to vector<2x256xf32>
    %18 = arith.mulf %6, %17 : vector<2x256xf32>
    %c0_6 = arith.constant 0 : index
    %c0_7 = arith.constant 0 : index
    %19 = vector.load %arg2[%c0_6, %c0_7] : memref<2x256xf32, #tpu.memory_space<vmem>>, vector<2x256xf32>
    tpu.vector_store %arg2[%c0_6, %c0_7], %18 {strides = array<i32>} : memref<2x256xf32, #tpu.memory_space<vmem>>, vector<2x256xf32>,
    return
  }
  func.func @transform_0(%arg0: i32) -> (i32, i32) {
    %c0_i32 = arith.constant 0 : i32
    %c0_i32_0 = arith.constant 0 : i32
    return %arg0, %c0_i32 : i32, i32
  }
  func.func @transform_1(%arg0: i32) -> (i32, i32) {
    %c0_i32 = arith.constant 0 : i32
    %c0_i32_0 = arith.constant 0 : i32
    return %arg0, %c0_i32 : i32, i32
  }
}

</mosaic_0001>

<llo_original>
// kernel: tpu_custom_call.1
$region0: #{tpu_custom_call.1}
  #allocation0 [shape = 'u32[]', space=smem, size = 0x4, offset = 0x4, fixed_abs, tag = 'smem constant byte address 0x4 - core index']
  #allocation1 [shape = 'u32[144,128]{1,0:T(1,128)}', space=vmem, size = 0x12000, scoped, tag = 'internal scratch']
  %s0 = inlined_call_operand.hbm [shape: f32[2,256], index: 0, kind: input, shape index: {}]
  %s1 = inlined_call_operand.hbm [shape: f32[2,256], index: 1, kind: output, shape index: {}]
  %s2 = sld [smem:[#allocation0]]
  $region18: #{tpu_custom_call.1} parent=0
    _
  %s4 = ssub.s32 1, %s2
  %s5 = scalar_select 0, %s4, %s2
  $region1: #{tpu_custom_call.1} parent=0
    #allocation2 [shape = 'u8[2048]{0}', space=vmem, size = 0x800, scoped, tag = 'input window, operand 0, single buffered']
    #allocation3 [shape = 's32[1]{0}', space=sflag, size = 0x4, scoped, tag = 'scoped memory for tpu_custom_call.1']
    #allocation4 [shape = 's32[1]{0}', space=sflag, size = 0x4, scoped, tag = 'scoped memory for tpu_custom_call.1']
    #allocation5 [shape = 'u8[2048]{0}', space=vmem, size = 0x800, scoped, tag = 'output window, operand 0, single buffered']
    %6 = vsyncpa [#allocation3], 0
    %7 = vsyncpa [#allocation4], 0
    // Predicated region
    $region2: #{tpu_custom_call.1} parent=1 // pred_check
      _
    $region3: #{tpu_custom_call.1} parent=1 // pred_check_branch
      %9 = sbr.rel (0) target = $region5
    $region4: #{tpu_custom_call.1} parent=1 // pred_region
      %s11 = ssub.s32 64, 64
      %12 = vsyncadd [#allocation3], %s11
      %s14 = sshll.u32 [#allocation2], 4
      %s15 = int_to_ptr.vmem [resolvable:$true] %s14
      %17 = dma.hbm_to_vmem [thread:$0]  %s0, 64, %s15, [#allocation3]
    $region5: #{tpu_custom_call.1} parent=1 // pred_fallthru
      _
    // Predicated region
    $region6: #{tpu_custom_call.1} parent=1 // pred_check
      _
    $region7: #{tpu_custom_call.1} parent=1 // pred_check_branch
      %19 = sbr.rel (0) target = $region9
    $region8: #{tpu_custom_call.1} parent=1 // pred_region
      %20 = dma.done [#allocation3], 64
    $region9: #{tpu_custom_call.1} parent=1 // pred_fallthru
      _
    %v21 = vld [vmem:[#allocation2] sm:$0xf]
    %v24 = vunpack.c.l.s4 1983009808
    %v25 = vunpack.c.0.s8 %v24
    %v26 = vlaneseq
    %v27 = vshrl.u32 %v26, 7
    %v28 = vsub.s32 %v25, %v27
    %v29 = vrot.slane %v21, %v28
    %v30 = vcombine.high %v29, %v29
    %vm33 = vcmask 1041408
    %v34 = vsel %vm33, %v29, 0.0
    %v35 = vsel %vm33, %v30, 0.0
    %v36 = vadd.f32 %v34, %v35
    %37 = vadd.xlane.f32.xlu0 %v36
    %v38 = vpop.xlane.xlu0 %37
    %v39 = vmul.f32 %v38, 0.00390625
    %v42 = vunpack.c.l.s4 269488144
    %v43 = vunpack.c.0.s8 %v42
    %v44 = vlaneseq
    %v45 = vshrl.u32 %v44, 7
    %v46 = vsub.s32 %v43, %v45
    %v47 = vrot.slane %v39, %v46
    %v49 = vsub.f32 %v21, %v47
    %v50 = vmul.f32 %v49, %v49
    %v53 = vunpack.c.l.s4 1983009808
    %v54 = vunpack.c.0.s8 %v53
    %v55 = vlaneseq
    %v56 = vshrl.u32 %v55, 7
    %v57 = vsub.s32 %v54, %v56
    %v58 = vrot.slane %v50, %v57
    %v59 = vcombine.high %v58, %v58
    %v62 = vsel %vm33, %v58, 0.0
    %v63 = vsel %vm33, %v59, 0.0
    %v64 = vadd.f32 %v62, %v63
    %65 = vadd.xlane.f32.xlu0 %v64
    %v66 = vpop.xlane.xlu0 %65
    %v67 = vmul.f32 %v66, 0.003921569
    %v68 = vrsqrt.pop %v67
    %v69 = vmul.f32 %v67, %v68
    %vm70 = vcmp.eq.f32.partialorder %v67, inf
    %v71 = vsel %vm70, %v67, %v69
    %vm72 = vcmp.eq.f32.partialorder %v67, 0.0
    %v73 = vand.u32 %v67, 2147483648
    %v74 = vsel %vm72, %v73, %v71
    %v75 = vadd.f32 %v74, 1e-06
    %v76 = vrcp.pop %v75
    %v77 = vmul.f32 1.0, %v76
    %v80 = vunpack.c.l.s4 269488144
    %v81 = vunpack.c.0.s8 %v80
    %v82 = vlaneseq
    %v83 = vshrl.u32 %v82, 7
    %v84 = vsub.s32 %v81, %v83
    %v85 = vrot.slane %v77, %v84
    %v87 = vmul.f32 %v49, %v85
    %88 = vst [vmem:[#allocation5] sm:$0xf] %v87
    // Predicated region
    $region10: #{tpu_custom_call.1} parent=1 // pred_check
      _
    $region11: #{tpu_custom_call.1} parent=1 // pred_check_branch
      %90 = sbr.rel (0) target = $region13
    $region12: #{tpu_custom_call.1} parent=1 // pred_region
      %s92 = ssub.s32 64, 64
      %93 = vsyncadd [#allocation4], %s92
      %s95 = sshll.u32 [#allocation5], 4
      %s96 = int_to_ptr.vmem [resolvable:$true] %s95
      %98 = dma.vmem_to_hbm [thread:$0]  %s96, 64, %s1, [#allocation4]
    $region13: #{tpu_custom_call.1} parent=1 // pred_fallthru
      _
    // Predicated region
    $region14: #{tpu_custom_call.1} parent=1 // pred_check
      _
    $region15: #{tpu_custom_call.1} parent=1 // pred_check_branch
      %100 = sbr.rel (0) target = $region17
    $region16: #{tpu_custom_call.1} parent=1 // pred_region
      %101 = dma.done [#allocation4], 64
    $region17: #{tpu_custom_call.1} parent=1 // pred_fallthru
      _
    %102 = vsyncpa [#allocation3], 1
    %103 = vsyncpa [#allocation4], 1

</llo_original>
